<compile_context>
chip_gen: v7x
topology: tpu7x:2x2x1
jax: 0.10.0
libtpu: 0.0.40
codegen_flags: <defaults>
</compile_context>

<pallas_src>
import numpy as np

import jax
import jax.numpy as jnp
from jax.experimental import pallas as pl
from jax.experimental.pallas import tpu as pltpu


_MAX_LANE_TILE = 2048   # lanes per block (f32: 4 rows * 2048 * 4 B = 32 KiB/buffer)


# ------------------------------- kernel --------------------------------------
def _perm_rows_kernel(perm_ref, x_ref, o_ref):
    """Exact gather along sublanes.

    perm_ref: (S,) int32 in SMEM (scalar-prefetched permutation)
    x_ref:    (L, TN) VMEM block — gathered axis on sublanes, lanes dense
    o_ref:    (S, TN) VMEM block
    """
    S = o_ref.shape[0]
    # S is tiny and static (== 4): fully unrolled full-lane row copies.
    for j in range(S):
        src = perm_ref[j]
        o_ref[pl.ds(j, 1), :] = x_ref[pl.ds(src, 1), :]


# ------------------------------ wrapper ---------------------------------------
def _pick_lane_tile(n, max_tile=_MAX_LANE_TILE):
    """Largest multiple-of-128 tile <= max_tile dividing n, else the full extent."""
    if n <= max_tile:
        return n
    for t in range(max_tile, 127, -128):
        if n % t == 0:
            return t
    # TODO(synk): if n is large and has no multiple-of-128 divisor, fall back to a
    # single full block (could pad lanes instead to restore tiling).
    return n


def _gather_last_axis(x, perm):
    """out[..., j] = x[..., perm[j]] as exact sublane row copies (one pallas_call)."""
    S = int(perm.shape[0])
    L = int(x.shape[-1])
    lead = x.shape[:-1]
    N = int(np.prod(lead))

    # Gathered axis -> sublanes; all other dims folded onto lanes (lane-dense).
    xt = jnp.moveaxis(x, -1, 0).reshape(L, N)

    TN = _pick_lane_tile(N)
    grid = (N // TN,)
    itemsize = jnp.dtype(x.dtype).itemsize

    out_t = pl.pallas_call(
        _perm_rows_kernel,
        out_shape=jax.ShapeDtypeStruct((S, N), x.dtype),
        grid_spec=pltpu.PrefetchScalarGridSpec(
            num_scalar_prefetch=1,
            grid=grid,
            in_specs=[pl.BlockSpec((L, TN), lambda i, perm_ref: (0, i))],
            out_specs=pl.BlockSpec((S, TN), lambda i, perm_ref: (0, i)),
        ),
        compiler_params=pltpu.CompilerParams(
            dimension_semantics=("parallel",)),
        cost_estimate=pl.CostEstimate(
            flops=0,
            transcendentals=0,
            bytes_accessed=(L * N + S * N) * itemsize),
    )(perm.astype(jnp.int32), xt)

    # (S, N) -> (S, *lead) -> (*lead, S)
    return jnp.moveaxis(out_t.reshape((S,) + tuple(lead)), 0, -1)


def shuffle_sample_forward(x, key, training=True):
    """Pallas port of shuffle_sample.forward."""
    if not training:
        return x                                    # eval path: identity
    s = x.shape[-2]
    assert s == 4
    # torch.randperm(s) equivalent (explicit key instead of torch's global RNG).
    index = jax.random.permutation(key, s)
    # Reference quirk preserved: perm length comes from shape[-2] but is applied
    # to the LAST axis (output last dim becomes s if it differs).
    return _gather_last_axis(x, index)


# --------------------------------- main ---------------------------------------
if __name__ == "__main__":
    root = jax.random.PRNGKey(0)
    k_x, k_perm = jax.random.split(root)

    # x: (batch=2, channels=4, blocks=8, s=4, samples=4); module asserts shape[-2]==4
    x = jax.random.normal(k_x, (2, 4, 8, 4, 4), dtype=jnp.float32)

    out = shuffle_sample_forward(x, k_perm, training=True)
    out = jax.block_until_ready(out)

    # Reference: same permutation (same key), gathered along the last axis.
    perm = jax.random.permutation(k_perm, x.shape[-2])
    ref = jnp.take(x, perm, axis=-1)
    assert out.shape == x.shape and out.dtype == x.dtype
    # Pure data movement => bit-exact.
    assert bool(jnp.array_equal(out, ref)), "mismatch vs gather reference"

    # Eval path must be identity.
    out_eval = shuffle_sample_forward(x, k_perm, training=False)
    assert bool(jnp.array_equal(out_eval, x))

    print("KERNEL_OK")
</pallas_src>

<mosaic_0001>
module attributes {stable_mosaic.version = 11 : i64} {
  func.func @_perm_rows_kernel(%arg0: i32, %arg1: memref<4xi32, #tpu.memory_space<smem>>, %arg2: memref<4x256xf32, #tpu.memory_space<vmem>>, %arg3: memref<4x256xf32, #tpu.memory_space<vmem>>) attributes {dimension_semantics = [#tpu.dimension_semantics<parallel>], iteration_bounds = array<i64: 1>, scalar_prefetch = 1 : i64, scratch_operands = 0 : i64, tpu.core_type = #tpu.core_type<tc>, window_params = [{transform_indices = @transform_0, window_bounds = array<i64: 4, 256>}, {transform_indices = @transform_1, window_bounds = array<i64: 4, 256>}]} {
    %c0 = arith.constant 0 : index
    %0 = memref.load %arg1[%c0] : memref<4xi32, #tpu.memory_space<smem>>
    %1 = arith.index_cast %0 : i32 to index
    %c0_0 = arith.constant 0 : index
    %2 = vector.load %arg2[%1, %c0_0] : memref<4x256xf32, #tpu.memory_space<vmem>>, vector<1x256xf32>
    %c0_1 = arith.constant 0 : index
    %c0_2 = arith.constant 0 : index
    %3 = vector.load %arg3[%c0_1, %c0_2] : memref<4x256xf32, #tpu.memory_space<vmem>>, vector<1x256xf32>
    tpu.vector_store %arg3[%c0_1, %c0_2], %2 {strides = array<i32>} : memref<4x256xf32, #tpu.memory_space<vmem>>, vector<1x256xf32>,
    %c1 = arith.constant 1 : index
    %4 = memref.load %arg1[%c1] : memref<4xi32, #tpu.memory_space<smem>>
    %5 = arith.index_cast %4 : i32 to index
    %c0_3 = arith.constant 0 : index
    %6 = vector.load %arg2[%5, %c0_3] : memref<4x256xf32, #tpu.memory_space<vmem>>, vector<1x256xf32>
    %c1_4 = arith.constant 1 : index
    %c0_5 = arith.constant 0 : index
    %7 = vector.load %arg3[%c1_4, %c0_5] : memref<4x256xf32, #tpu.memory_space<vmem>>, vector<1x256xf32>
    tpu.vector_store %arg3[%c1_4, %c0_5], %6 {strides = array<i32>} : memref<4x256xf32, #tpu.memory_space<vmem>>, vector<1x256xf32>,
    %c2 = arith.constant 2 : index
    %8 = memref.load %arg1[%c2] : memref<4xi32, #tpu.memory_space<smem>>
    %9 = arith.index_cast %8 : i32 to index
    %c0_6 = arith.constant 0 : index
    %10 = vector.load %arg2[%9, %c0_6] : memref<4x256xf32, #tpu.memory_space<vmem>>, vector<1x256xf32>
    %c2_7 = arith.constant 2 : index
    %c0_8 = arith.constant 0 : index
    %11 = vector.load %arg3[%c2_7, %c0_8] : memref<4x256xf32, #tpu.memory_space<vmem>>, vector<1x256xf32>
    tpu.vector_store %arg3[%c2_7, %c0_8], %10 {strides = array<i32>} : memref<4x256xf32, #tpu.memory_space<vmem>>, vector<1x256xf32>,
    %c3 = arith.constant 3 : index
    %12 = memref.load %arg1[%c3] : memref<4xi32, #tpu.memory_space<smem>>
    %13 = arith.index_cast %12 : i32 to index
    %c0_9 = arith.constant 0 : index
    %14 = vector.load %arg2[%13, %c0_9] : memref<4x256xf32, #tpu.memory_space<vmem>>, vector<1x256xf32>
    %c3_10 = arith.constant 3 : index
    %c0_11 = arith.constant 0 : index
    %15 = vector.load %arg3[%c3_10, %c0_11] : memref<4x256xf32, #tpu.memory_space<vmem>>, vector<1x256xf32>
    tpu.vector_store %arg3[%c3_10, %c0_11], %14 {strides = array<i32>} : memref<4x256xf32, #tpu.memory_space<vmem>>, vector<1x256xf32>,
    return
  }
  func.func @transform_0(%arg0: i32, %arg1: memref<4xi32, #tpu.memory_space<smem>>) -> (i32, i32) {
    %c0_i32 = arith.constant 0 : i32
    %c0_i32_0 = arith.constant 0 : i32
    return %c0_i32, %arg0 : i32, i32
  }
  func.func @transform_1(%arg0: i32, %arg1: memref<4xi32, #tpu.memory_space<smem>>) -> (i32, i32) {
    %c0_i32 = arith.constant 0 : i32
    %c0_i32_0 = arith.constant 0 : i32
    return %c0_i32, %arg0 : i32, i32
  }
}

</mosaic_0001>

<llo_original>
// kernel: tpu_custom_call.1
$region0: #{tpu_custom_call.1}
  #allocation0 [shape = 'u32[]', space=smem, size = 0x4, offset = 0x4, fixed_abs, tag = 'smem constant byte address 0x4 - core index']
  #allocation1 [shape = 'u32[144,128]{1,0:T(1,128)}', space=vmem, size = 0x12000, scoped, tag = 'internal scratch']
  #allocation2 [shape = 's32[1]{0}', space=sflag, size = 0x4, scoped, tag = 'scoped memory for tpu_custom_call.1']
  #allocation3 [shape = 'u8[512]{0}', space=smem, size = 0x200, scoped, tag = 'prefetched SMEM operand 0']
  %s0 = inlined_call_operand.hbm [shape: s32[4], index: 0, kind: input, shape index: {}]
  %s1 = inlined_call_operand.hbm [shape: f32[4,256], index: 1, kind: input, shape index: {}]
  %s2 = inlined_call_operand.hbm [shape: f32[4,256], index: 2, kind: output, shape index: {}]
  %s3 = sld [smem:[#allocation0]]
  $region18: #{tpu_custom_call.1} parent=0
    _
  %s5 = ssub.s32 1, %s3
  %s6 = scalar_select 0, %s5, %s3
  %8 = dma.hbm_to_smem %s0, 16, [#allocation3], [#allocation2]
  %9 = dma.done [#allocation2], 16
  %10 = sfence
  $region1: #{tpu_custom_call.1} parent=0
    #allocation4 [shape = 'u8[4096]{0}', space=vmem, size = 0x1000, scoped, tag = 'input window, operand 1, single buffered']
    #allocation5 [shape = 's32[1]{0}', space=sflag, size = 0x4, scoped, tag = 'scoped memory for tpu_custom_call.1']
    #allocation6 [shape = 's32[1]{0}', space=sflag, size = 0x4, scoped, tag = 'scoped memory for tpu_custom_call.1']
    #allocation7 [shape = 'u8[4096]{0}', space=vmem, size = 0x1000, scoped, tag = 'output window, operand 0, single buffered']
    %11 = vsyncpa [#allocation5], 0
    %12 = vsyncpa [#allocation6], 0
    // Predicated region
    $region2: #{tpu_custom_call.1} parent=1 // pred_check
      _
    $region3: #{tpu_custom_call.1} parent=1 // pred_check_branch
      %14 = sbr.rel (0) target = $region5
    $region4: #{tpu_custom_call.1} parent=1 // pred_region
      %s16 = ssub.s32 128, 128
      %17 = vsyncadd [#allocation5], %s16
      %s19 = sshll.u32 [#allocation4], 4
      %s20 = int_to_ptr.vmem [resolvable:$true] %s19
      %22 = dma.hbm_to_vmem [thread:$0]  %s1, 128, %s20, [#allocation5]
    $region5: #{tpu_custom_call.1} parent=1 // pred_fallthru
      _
    // Predicated region
    $region6: #{tpu_custom_call.1} parent=1 // pred_check
      _
    $region7: #{tpu_custom_call.1} parent=1 // pred_check_branch
      %24 = sbr.rel (0) target = $region9
    $region8: #{tpu_custom_call.1} parent=1 // pred_region
      %25 = dma.done [#allocation5], 128
    $region9: #{tpu_custom_call.1} parent=1 // pred_fallthru
      _
    %s26 = sld [smem:[#allocation3]]
    %s27 = sshra.s32 %s26, 2
    %s28 = sand.u32 %s26, 3
    %s29 = sshra.s32 %s26, 2
    %s30 = sand.u32 %s26, 3
    %s31 = smul.u32 %s27, 2
    %s32 = smul.u32 %s31, 4
    %s33 = sadd.s32 %s32, %s30
    %s34 = scalar_lea.vmem [#allocation4], %s33
    %v35 = vld [vmem:[%s34] ss:$4 sm:$0x3]
    %v36 = vlaneseq
    %vm37 = vcmp.ge.s32.totalorder %v36, 0
    %vm38 = vcmp.lt.s32.totalorder %v36, 256
    %vm39 = vmand %vm37, %vm38
    %40 = vst.msk [vmem:[#allocation7] ss:$4 sm:$0x3] %vm39, %v35
    %s41 = sld [smem:[#allocation3 + $0x1]]
    %s42 = sshra.s32 %s41, 2
    %s43 = sand.u32 %s41, 3
    %s44 = sshra.s32 %s41, 2
    %s45 = sand.u32 %s41, 3
    %s46 = smul.u32 %s42, 2
    %s47 = smul.u32 %s46, 4
    %s48 = sadd.s32 %s47, %s45
    %s49 = scalar_lea.vmem [#allocation4], %s48
    %v50 = vld [vmem:[%s49] ss:$4 sm:$0x3]
    %s51 = scalar_lea.vmem [#allocation7], 1
    %52 = vst.msk [vmem:[%s51] ss:$4 sm:$0x3] %vm39, %v50
    %s53 = sld [smem:[#allocation3 + $0x2]]
    %s54 = sshra.s32 %s53, 2
    %s55 = sand.u32 %s53, 3
    %s56 = sshra.s32 %s53, 2
    %s57 = sand.u32 %s53, 3
    %s58 = smul.u32 %s54, 2
    %s59 = smul.u32 %s58, 4
    %s60 = sadd.s32 %s59, %s57
    %s61 = scalar_lea.vmem [#allocation4], %s60
    %v62 = vld [vmem:[%s61] ss:$4 sm:$0x3]
    %s63 = scalar_lea.vmem [#allocation7], 2
    %64 = vst.msk [vmem:[%s63] ss:$4 sm:$0x3] %vm39, %v62
    %s65 = sld [smem:[#allocation3 + $0x3]]
    %s66 = sshra.s32 %s65, 2
    %s67 = sand.u32 %s65, 3
    %s68 = sshra.s32 %s65, 2
    %s69 = sand.u32 %s65, 3
    %s70 = smul.u32 %s66, 2
    %s71 = smul.u32 %s70, 4
    %s72 = sadd.s32 %s71, %s69
    %s73 = scalar_lea.vmem [#allocation4], %s72
    %v74 = vld [vmem:[%s73] ss:$4 sm:$0x3]
    %s75 = scalar_lea.vmem [#allocation7], 3
    %76 = vst.msk [vmem:[%s75] ss:$4 sm:$0x3] %vm39, %v74
    // Predicated region
    $region10: #{tpu_custom_call.1} parent=1 // pred_check
      _
    $region11: #{tpu_custom_call.1} parent=1 // pred_check_branch
      %78 = sbr.rel (0) target = $region13
    $region12: #{tpu_custom_call.1} parent=1 // pred_region
      %s80 = ssub.s32 128, 128
      %81 = vsyncadd [#allocation6], %s80
      %s83 = sshll.u32 [#allocation7], 4
      %s84 = int_to_ptr.vmem [resolvable:$true] %s83
      %86 = dma.vmem_to_hbm [thread:$0]  %s84, 128, %s2, [#allocation6]
    $region13: #{tpu_custom_call.1} parent=1 // pred_fallthru
      _
    // Predicated region
    $region14: #{tpu_custom_call.1} parent=1 // pred_check
      _
    $region15: #{tpu_custom_call.1} parent=1 // pred_check_branch
      %88 = sbr.rel (0) target = $region17
    $region16: #{tpu_custom_call.1} parent=1 // pred_region
      %89 = dma.done [#allocation6], 128
    $region17: #{tpu_custom_call.1} parent=1 // pred_fallthru
      _
    %90 = vsyncpa [#allocation5], 1
    %91 = vsyncpa [#allocation6], 1

</llo_original>
